<compile_context>
chip_gen: v6e
topology: v6e:2x2x1
jax: 0.10.0
libtpu: 0.0.40
codegen_flags: <defaults>
</compile_context>

<pallas_src>
from functools import partial

import numpy as np
import jax
import jax.numpy as jnp
from jax.experimental import pallas as pl
from jax.experimental.pallas import tpu as pltpu

NC = 128  # lane-dense output width


# -----------------------------------------------------------------------------
# Fused kernel: MeanScaler + (decomp + seasonal/trend + args_proj as ONE matmul)
#               + StudentT domain map, emitted as a single lane-dense (TB, 128) slab.
# -----------------------------------------------------------------------------
def _dlinear_fused_kernel(ds_ref, pt_ref, obs_ref, w_ref, b_ref, out_ref, *, P):
    x = pt_ref[...]            # (TB, L)
    w = obs_ref[...]           # (TB, L)

    # ---- MeanScaler (dim=-1, keepdim=True): scale = weighted mean |x|, loc = 0 ----
    weighted_sum = jnp.sum(jnp.abs(x) * w, axis=1, keepdims=True)      # (TB, 1)
    total_weight = jnp.sum(w, axis=1, keepdims=True)                   # (TB, 1)
    scale = weighted_sum / jnp.maximum(total_weight, 1.0)
    # batch-wide fallback is precomputed on the host (allows batch tiling)
    scale = jnp.where(total_weight > 0.0, scale, ds_ref[0, 0])
    scale = jnp.maximum(scale, 1e-10)
    x_scaled = x / scale                                               # exact divide

    # ---- decomp + linear_seasonal + linear_trend + args_proj: ONE matmul ----
    # w_ref is (L, 128): cols [0:3P) hold the fully-folded weight, rest are zero.
    raw = jnp.dot(x_scaled, w_ref[...],
                  preferred_element_type=jnp.float32) + b_ref[...]     # (TB, 128)

    # numerically stable softplus from basic VPU/EUP ops
    sp = jnp.maximum(raw, 0.0) + jnp.log(1.0 + jnp.exp(-jnp.abs(raw)))
    col = jax.lax.broadcasted_iota(jnp.int32, raw.shape, 1)
    scale_b = jnp.broadcast_to(scale, raw.shape)
    # StudentT domain map: df = 2 + softplus, loc = identity, scale = softplus;
    # spare lanes (col >= 3P) carry the MeanScaler scale.
    out_ref[...] = jnp.where(col < P, 2.0 + sp,
                   jnp.where(col < 2 * P, raw,
                   jnp.where(col < 3 * P, sp, scale_b)))


# -----------------------------------------------------------------------------
# Host-side weight precomputation (float64 folds, cast to f32 at the end)
# -----------------------------------------------------------------------------
def build_avg_matrix(L, K):
    """(L, L) matrix so that x @ A == replicate-padded AvgPool1d(K, stride=1)(x)."""
    assert K % 2 == 1, "moving-average kernel_size must be odd for length-preserving output"
    pad = (K - 1) // 2
    A = np.zeros((L, L), np.float64)
    for t in range(L):
        for k in range(K):
            i = min(max(t + k - pad, 0), L - 1)
            A[i, t] += 1.0 / K
    return A


def build_fused_params(params, L, P, H, K):
    """Collapse decomp + seasonal/trend Linears + args_proj into ONE (L, 128) weight."""
    A = build_avg_matrix(L, K)                                         # (L, L) f64
    Ws = np.asarray(params["W_seasonal"], np.float64)                  # (L, P*H)
    Wt = np.asarray(params["W_trend"], np.float64)                     # (L, P*H)
    W_comb = Ws + A @ (Wt - Ws)                                        # (L, P*H)
    b_comb = (np.asarray(params["b_seasonal"], np.float64)
              + np.asarray(params["b_trend"], np.float64))             # (1, P*H)

    Wa = np.asarray(params["W_args"], np.float64)                      # (H, 3)
    ba = np.asarray(params["b_args"], np.float64)                      # (1, 3)
    # block-diagonal args_proj weight: columns [0:P)=df, [P:2P)=loc, [2P:3P)=scale
    W_blk = np.zeros((P * H, 3 * P), np.float64)
    b_blk = np.zeros((1, 3 * P), np.float64)
    for p in range(P):
        for j in range(3):
            W_blk[p * H:(p + 1) * H, j * P + p] = Wa[:, j]
            b_blk[0, j * P + p] = ba[0, j]

    # full fold: the entire network (up to the domain map) is one affine map
    W_total = W_comb @ W_blk                                           # (L, 3P)
    b_total = b_comb @ W_blk + b_blk                                   # (1, 3P)

    # lane-dense pad to 128 output columns
    W_pad = np.zeros((L, NC), np.float64)
    W_pad[:, :3 * P] = W_total
    b_pad = np.zeros((1, NC), np.float64)
    b_pad[:, :3 * P] = b_total
    return {"W": jnp.asarray(W_pad, jnp.float32), "b": jnp.asarray(b_pad, jnp.float32)}


# -----------------------------------------------------------------------------
# Wrapper
# -----------------------------------------------------------------------------
def dlinear_forward(fused, past_target, past_observed, P, tb=None):
    B, L = past_target.shape

    # batch-wide MeanScaler fallback, hoisted out of the kernel so B can be tiled
    batch_sum = jnp.sum(jnp.abs(past_target) * past_observed)
    batch_weight = jnp.sum(past_observed)
    default_scale = (batch_sum / jnp.maximum(batch_weight, 1.0)).reshape(1, 1)
    default_scale = default_scale.astype(jnp.float32)

    if tb is None:
        tb = B if B <= 256 else 256          # TB=256 fits v7x's 64 MiB VMEM with huge margin
    n_tiles = -(-B // tb)
    Bp = n_tiles * tb
    pt, obs = past_target, past_observed
    if Bp != B:
        pad = Bp - B
        pt = jnp.pad(pt, ((0, pad), (0, 0)))
        obs = jnp.pad(obs, ((0, pad), (0, 0)))   # padded rows get default_scale, sliced off below

    out = pl.pallas_call(
        partial(_dlinear_fused_kernel, P=P),
        out_shape=jax.ShapeDtypeStruct((Bp, NC), jnp.float32),
        grid=(n_tiles,),
        in_specs=[
            pl.BlockSpec((1, 1), lambda i: (0, 0),
                         memory_space=pltpu.MemorySpace.SMEM),      # default_scale scalar
            pl.BlockSpec((tb, L), lambda i: (i, 0)),                # past_target tile
            pl.BlockSpec((tb, L), lambda i: (i, 0)),                # past_observed tile
            pl.BlockSpec((L, NC), lambda i: (0, 0)),                # fused weight (broadcast)
            pl.BlockSpec((1, NC), lambda i: (0, 0)),                # fused bias (broadcast)
        ],
        out_specs=pl.BlockSpec((tb, NC), lambda i: (i, 0)),
        compiler_params=pltpu.CompilerParams(
            dimension_semantics=("parallel",)),                     # v7x megacore sharding
    )(default_scale, pt, obs, fused["W"], fused["b"])

    out = out[:B]
    df = out[:, :P]
    dloc = out[:, P:2 * P]
    dscale = out[:, 2 * P:3 * P]
    scale = out[:, 3 * P:3 * P + 1]
    loc = jnp.zeros_like(scale)              # MeanScaler loc is identically zero
    return (df, dloc, dscale), loc, scale


# -----------------------------------------------------------------------------
# Pure-JAX reference (mirrors the un-fused PyTorch forward) for verification
# -----------------------------------------------------------------------------
def reference_forward(params, past_target, past_observed, K, P, H):
    x, w = past_target, past_observed
    B, L = x.shape

    weighted_sum = jnp.sum(jnp.abs(x) * w, axis=1, keepdims=True)
    total_weight = jnp.sum(w, axis=1, keepdims=True)
    scale = weighted_sum / jnp.maximum(total_weight, 1.0)
    default_scale = jnp.sum(weighted_sum) / jnp.maximum(jnp.sum(total_weight), 1.0)
    scale = jnp.where(total_weight > 0, scale, default_scale)
    scale = jnp.maximum(scale, 1e-10)
    xs = x / scale
    loc = jnp.zeros_like(scale)

    pad = (K - 1) // 2
    xp = jnp.concatenate(
        [jnp.repeat(xs[:, :1], pad, axis=1), xs, jnp.repeat(xs[:, -1:], pad, axis=1)], axis=1)
    trend = jnp.stack([jnp.mean(xp[:, t:t + K], axis=1) for t in range(L)], axis=1)
    res = xs - trend

    seasonal_out = res @ params["W_seasonal"] + params["b_seasonal"]
    trend_out = trend @ params["W_trend"] + params["b_trend"]
    nn_out = seasonal_out + trend_out
    hid = nn_out.reshape(B, P, H)

    raw = hid @ params["W_args"] + params["b_args"]
    df = 2.0 + jax.nn.softplus(raw[..., 0])
    dloc = raw[..., 1]
    dscale = jax.nn.softplus(raw[..., 2])
    return (df, dloc, dscale), loc, scale


if __name__ == "__main__":
    B, L, P, H, K = 2, 32, 8, 32, 25  # batch, context_length, prediction_length, hidden, kernel_size

    key = jax.random.PRNGKey(0)
    k1, k2, k3, k4, k5, k6 = jax.random.split(key, 6)

    past_target = jax.random.normal(k1, (B, L), jnp.float32) * 3.0 + 1.0
    past_observed = (jax.random.uniform(k2, (B, L)) > 0.1).astype(jnp.float32)

    params = {
        # make_linear_layer: uniform(-0.07, 0.07) weights, zero bias
        "W_seasonal": jax.random.uniform(k3, (L, P * H), jnp.float32, -0.07, 0.07),
        "b_seasonal": jnp.zeros((1, P * H), jnp.float32),
        "W_trend": jax.random.uniform(k4, (L, P * H), jnp.float32, -0.07, 0.07),
        "b_trend": jnp.zeros((1, P * H), jnp.float32),
        # args_proj: three Linear(H, 1) stacked as Linear(H, 3)
        "W_args": jax.random.uniform(k5, (H, 3), jnp.float32, -0.07, 0.07),
        "b_args": jax.random.uniform(k6, (1, 3), jnp.float32, -0.07, 0.07),
    }
    fused = build_fused_params(params, L, P, H, K)

    (df, dloc, dscale), loc, scale = dlinear_forward(fused, past_target, past_observed, P)
    jax.block_until_ready((df, dloc, dscale, loc, scale))

    (rdf, rdloc, rdscale), rloc, rscale = reference_forward(
        params, past_target, past_observed, K, P, H)

    # exact divide in the kernel -> tight tolerances on the scaler outputs
    np.testing.assert_allclose(np.asarray(scale), np.asarray(rscale), rtol=1e-5, atol=1e-7)
    np.testing.assert_allclose(np.asarray(loc), np.asarray(rloc), rtol=1e-5, atol=1e-7)
    # distr args: only f32 rounding-order differences from the float64 host fold
    for got, want in [(df, rdf), (dloc, rdloc), (dscale, rdscale)]:
        np.testing.assert_allclose(np.asarray(got), np.asarray(want), rtol=1e-4, atol=1e-5)

    print("KERNEL_OK")
</pallas_src>

<mosaic_0001>
module attributes {stable_mosaic.version = 11 : i64} {
  func.func @_dlinear_fused_kernel(%arg0: i32, %arg1: memref<1x1xf32, #tpu.memory_space<smem>>, %arg2: memref<2x32xf32, #tpu.memory_space<vmem>>, %arg3: memref<2x32xf32, #tpu.memory_space<vmem>>, %arg4: memref<32x128xf32, #tpu.memory_space<vmem>>, %arg5: memref<1x128xf32, #tpu.memory_space<vmem>>, %arg6: memref<2x128xf32, #tpu.memory_space<vmem>>) attributes {dimension_semantics = [#tpu.dimension_semantics<parallel>], iteration_bounds = array<i64: 1>, scalar_prefetch = 0 : i64, scratch_operands = 0 : i64, tpu.core_type = #tpu.core_type<tc>, window_params = [{transform_indices = @transform_0, window_bounds = array<i64: 1, 1>}, {transform_indices = @transform_1, window_bounds = array<i64: 2, 32>}, {transform_indices = @transform_2, window_bounds = array<i64: 2, 32>}, {pipeline_mode = #tpu.pipeline_mode<synchronous>, transform_indices = @transform_3, window_bounds = array<i64: 32, 128>}, {pipeline_mode = #tpu.pipeline_mode<synchronous>, transform_indices = @transform_4, window_bounds = array<i64: 1, 128>}, {transform_indices = @transform_5, window_bounds = array<i64: 2, 128>}]} {
    %c0 = arith.constant 0 : index
    %c0_0 = arith.constant 0 : index
    %0 = vector.load %arg2[%c0, %c0_0] : memref<2x32xf32, #tpu.memory_space<vmem>>, vector<2x32xf32>
    %c0_1 = arith.constant 0 : index
    %c0_2 = arith.constant 0 : index
    %1 = vector.load %arg3[%c0_1, %c0_2] : memref<2x32xf32, #tpu.memory_space<vmem>>, vector<2x32xf32>
    %2 = math.absf %0 : vector<2x32xf32>
    %3 = arith.mulf %2, %1 : vector<2x32xf32>
    %cst = arith.constant dense<0.000000e+00> : vector<2xf32>
    %4 = vector.multi_reduction <add>, %3, %cst [1] : vector<2x32xf32> to vector<2xf32>
    %5 = vector.shape_cast %4 : vector<2xf32> to vector<2x1xf32>
    %cst_3 = arith.constant dense<0.000000e+00> : vector<2xf32>
    %6 = vector.multi_reduction <add>, %1, %cst_3 [1] : vector<2x32xf32> to vector<2xf32>
    %7 = vector.shape_cast %6 : vector<2xf32> to vector<2x1xf32>
    %cst_4 = arith.constant 1.000000e+00 : f32
    %8 = vector.broadcast %cst_4 : f32 to vector<2x1xf32>
    %9 = arith.maximumf %7, %8 : vector<2x1xf32>
    %10 = arith.divf %5, %9 : vector<2x1xf32>
    %cst_5 = arith.constant 0.000000e+00 : f32
    %11 = vector.broadcast %cst_5 : f32 to vector<2x1xf32>
    %12 = arith.cmpf ogt, %7, %11 : vector<2x1xf32>
    %c0_6 = arith.constant 0 : index
    %c0_7 = arith.constant 0 : index
    %13 = memref.load %arg1[%c0_6, %c0_7] : memref<1x1xf32, #tpu.memory_space<smem>>
    %14 = vector.broadcast %13 : f32 to vector<2x1xf32>
    %15 = arith.select %12, %10, %14 : vector<2x1xi1>, vector<2x1xf32>
    %cst_8 = arith.constant 1.000000e-10 : f32
    %16 = vector.broadcast %cst_8 : f32 to vector<2x1xf32>
    %17 = arith.maximumf %15, %16 : vector<2x1xf32>
    %18 = vector.broadcast %17 : vector<2x1xf32> to vector<2x32xf32>
    %19 = arith.divf %0, %18 : vector<2x32xf32>
    %c0_9 = arith.constant 0 : index
    %c0_10 = arith.constant 0 : index
    %20 = vector.load %arg4[%c0_9, %c0_10] : memref<32x128xf32, #tpu.memory_space<vmem>>, vector<32x128xf32>
    %cst_11 = arith.constant dense<0.000000e+00> : vector<2x128xf32>
    %21 = tpu.matmul %19, %20, %cst_11 {dimension_numbers = #tpu.dot_dimension_numbers<[1], [0], [0], [1], [0, 0, 1, 1], [], []>} : vector<2x32xf32>, vector<32x128xf32>, vector<2x128xf32> -> vector<2x128xf32>
    %c0_12 = arith.constant 0 : index
    %c0_13 = arith.constant 0 : index
    %22 = vector.load %arg5[%c0_12, %c0_13] : memref<1x128xf32, #tpu.memory_space<vmem>>, vector<1x128xf32>
    %23 = vector.broadcast %22 : vector<1x128xf32> to vector<2x128xf32>
    %24 = arith.addf %21, %23 : vector<2x128xf32>
    %cst_14 = arith.constant 0.000000e+00 : f32
    %25 = vector.broadcast %cst_14 : f32 to vector<2x128xf32>
    %26 = arith.maximumf %24, %25 : vector<2x128xf32>
    %27 = math.absf %24 : vector<2x128xf32>
    %cst_15 = arith.constant 0.000000e+00 : f32
    %28 = vector.broadcast %cst_15 : f32 to vector<2x128xf32>
    %29 = arith.subf %28, %27 : vector<2x128xf32>
    %30 = math.exp %29 : vector<2x128xf32>
    %cst_16 = arith.constant 1.000000e+00 : f32
    %31 = vector.broadcast %cst_16 : f32 to vector<2x128xf32>
    %32 = arith.addf %31, %30 : vector<2x128xf32>
    %33 = math.log %32 : vector<2x128xf32>
    %34 = arith.addf %26, %33 : vector<2x128xf32>
    %35 = tpu.iota {dimensions = array<i32: 1>} : vector<2x128xi32>
    %36 = vector.shape_cast %17 : vector<2x1xf32> to vector<2x1xf32>
    %37 = vector.broadcast %36 : vector<2x1xf32> to vector<2x128xf32>
    %c8_i32 = arith.constant 8 : i32
    %38 = vector.broadcast %c8_i32 : i32 to vector<2x128xi32>
    %39 = arith.cmpi slt, %35, %38 : vector<2x128xi32>
    %cst_17 = arith.constant 2.000000e+00 : f32
    %40 = vector.broadcast %cst_17 : f32 to vector<2x128xf32>
    %41 = arith.addf %40, %34 : vector<2x128xf32>
    %c16_i32 = arith.constant 16 : i32
    %42 = vector.broadcast %c16_i32 : i32 to vector<2x128xi32>
    %43 = arith.cmpi slt, %35, %42 : vector<2x128xi32>
    %c24_i32 = arith.constant 24 : i32
    %44 = vector.broadcast %c24_i32 : i32 to vector<2x128xi32>
    %45 = arith.cmpi slt, %35, %44 : vector<2x128xi32>
    %46 = arith.select %45, %34, %37 : vector<2x128xi1>, vector<2x128xf32>
    %47 = arith.select %43, %24, %46 : vector<2x128xi1>, vector<2x128xf32>
    %48 = arith.select %39, %41, %47 : vector<2x128xi1>, vector<2x128xf32>
    %c0_18 = arith.constant 0 : index
    %c0_19 = arith.constant 0 : index
    %49 = vector.load %arg6[%c0_18, %c0_19] : memref<2x128xf32, #tpu.memory_space<vmem>>, vector<2x128xf32>
    tpu.vector_store %arg6[%c0_18, %c0_19], %48 {strides = array<i32>} : memref<2x128xf32, #tpu.memory_space<vmem>>, vector<2x128xf32>,
    return
  }
  func.func @transform_0(%arg0: i32) -> (i32, i32) {
    %c0_i32 = arith.constant 0 : i32
    %c0_i32_0 = arith.constant 0 : i32
    %c0_i32_1 = arith.constant 0 : i32
    return %c0_i32, %c0_i32_0 : i32, i32
  }
  func.func @transform_1(%arg0: i32) -> (i32, i32) {
    %c0_i32 = arith.constant 0 : i32
    %c0_i32_0 = arith.constant 0 : i32
    return %arg0, %c0_i32 : i32, i32
  }
  func.func @transform_2(%arg0: i32) -> (i32, i32) {
    %c0_i32 = arith.constant 0 : i32
    %c0_i32_0 = arith.constant 0 : i32
    return %arg0, %c0_i32 : i32, i32
  }
  func.func @transform_3(%arg0: i32) -> (i32, i32) {
    %c0_i32 = arith.constant 0 : i32
    %c0_i32_0 = arith.constant 0 : i32
    %c0_i32_1 = arith.constant 0 : i32
    return %c0_i32, %c0_i32_0 : i32, i32
  }
  func.func @transform_4(%arg0: i32) -> (i32, i32) {
    %c0_i32 = arith.constant 0 : i32
    %c0_i32_0 = arith.constant 0 : i32
    %c0_i32_1 = arith.constant 0 : i32
    return %c0_i32, %c0_i32_0 : i32, i32
  }
  func.func @transform_5(%arg0: i32) -> (i32, i32) {
    %c0_i32 = arith.constant 0 : i32
    %c0_i32_0 = arith.constant 0 : i32
    return %arg0, %c0_i32 : i32, i32
  }
}

</mosaic_0001>

<llo_original>
// kernel: tpu_custom_call.1
$region0: #{tpu_custom_call.1}
  #allocation0 [shape = 'u32[]', space=smem, size = 0x4, offset = 0x4, fixed_abs, tag = 'smem constant byte address 0x4 - core index']
  #allocation1 [shape = 'u32[144,128]{1,0:T(1,128)}', space=vmem, size = 0x12000, scoped, tag = 'internal scratch']
  #allocation2 [shape = 'f32[1,1]{1,0:T(1,128)S(6)}', space=smem, size = 0x200, scoped, tag = 'scoped memory for tpu_custom_call.1']
  %s0 = inlined_call_operand.<no memory space> [shape: f32[1,1], index: 0, kind: input, shape index: {}]
  %s1 = inlined_call_operand.vmem [shape: f32[2,32], index: 1, kind: input, shape index: {}]
  %s2 = inlined_call_operand.hbm [shape: f32[2,32], index: 2, kind: input, shape index: {}]
  %s3 = inlined_call_operand.hbm [shape: f32[32,128], index: 3, kind: input, shape index: {}]
  %s4 = inlined_call_operand.vmem [shape: f32[1,128], index: 4, kind: input, shape index: {}]
  %s5 = inlined_call_operand.hbm [shape: f32[2,128], index: 5, kind: output, shape index: {}]
  %s6 = sld [smem:[#allocation0]]
  $region38: #{tpu_custom_call.1} parent=0
    _
  %s8 = ssub.s32 1, %s6
  %s9 = scalar_select 0, %s8, %s6
  %10 = sst [smem:[#allocation2]] %s0
  $region1: #{tpu_custom_call.1} parent=0
    #allocation3 [shape = 'u8[1024]{0}', space=vmem, size = 0x400, scoped, tag = 'input window, operand 2, single buffered']
    #allocation4 [shape = 's32[1]{0}', space=sflag, size = 0x4, scoped, tag = 'scoped memory for tpu_custom_call.1']
    #allocation5 [shape = 's32[1]{0}', space=sflag, size = 0x4, scoped, tag = 'scoped memory for tpu_custom_call.1']
    #allocation6 [shape = 'u8[16384]{0}', space=vmem, size = 0x4000, scoped, tag = 'input window, operand 3, single buffered']
    #allocation7 [shape = 's32[1]{0}', space=sflag, size = 0x4, scoped, tag = 'scoped memory for tpu_custom_call.1']
    #allocation8 [shape = 'u8[1024]{0}', space=vmem, size = 0x400, scoped, tag = 'output window, operand 0, single buffered']
    %11 = vsyncpa [#allocation4], 0
    %12 = vsyncpa [#allocation7], 0
    %13 = vsyncpa [#allocation5], 0
    // Predicated region
    $region2: #{tpu_custom_call.1} parent=1 // pred_check
      _
    $region3: #{tpu_custom_call.1} parent=1 // pred_check_branch
      %15 = sbr.rel (0) target = $region5
    $region4: #{tpu_custom_call.1} parent=1 // pred_region
      _
    $region5: #{tpu_custom_call.1} parent=1 // pred_fallthru
      _
    // Predicated region
    $region6: #{tpu_custom_call.1} parent=1 // pred_check
      _
    $region7: #{tpu_custom_call.1} parent=1 // pred_check_branch
      %17 = sbr.rel (0) target = $region9
    $region8: #{tpu_custom_call.1} parent=1 // pred_region
      _
    $region9: #{tpu_custom_call.1} parent=1 // pred_fallthru
      _
    // Predicated region
    $region10: #{tpu_custom_call.1} parent=1 // pred_check
      _
    $region11: #{tpu_custom_call.1} parent=1 // pred_check_branch
      %19 = sbr.rel (0) target = $region13
    $region12: #{tpu_custom_call.1} parent=1 // pred_region
      %s21 = ssub.s32 32, 32
      %22 = vsyncadd [#allocation4], %s21
      %s24 = sshll.u32 [#allocation3], 4
      %s25 = int_to_ptr.vmem [resolvable:$true] %s24
      %27 = dma.hbm_to_vmem [thread:$0]  %s2, 32, %s25, [#allocation4]
    $region13: #{tpu_custom_call.1} parent=1 // pred_fallthru
      _
    // Predicated region
    $region14: #{tpu_custom_call.1} parent=1 // pred_check
      _
    $region15: #{tpu_custom_call.1} parent=1 // pred_check_branch
      %29 = sbr.rel (0) target = $region17
    $region16: #{tpu_custom_call.1} parent=1 // pred_region
      %s31 = ssub.s32 512, 512
      %32 = vsyncadd [#allocation7], %s31
      %s33 = sshll.u32 [#allocation6], 4
      %s34 = int_to_ptr.vmem [resolvable:$true] %s33
      %39 = dma.hbm_to_vmem [thread:$0]  %s3, 512, %s34, [#allocation7], 128, 128, 8
    $region17: #{tpu_custom_call.1} parent=1 // pred_fallthru
      _
    // Predicated region
    $region18: #{tpu_custom_call.1} parent=1 // pred_check
      _
    $region19: #{tpu_custom_call.1} parent=1 // pred_check_branch
      %41 = sbr.rel (0) target = $region21
    $region20: #{tpu_custom_call.1} parent=1 // pred_region
      _
    $region21: #{tpu_custom_call.1} parent=1 // pred_fallthru
      _
    // Predicated region
    $region22: #{tpu_custom_call.1} parent=1 // pred_check
      _
    $region23: #{tpu_custom_call.1} parent=1 // pred_check_branch
      %43 = sbr.rel (0) target = $region25
    $region24: #{tpu_custom_call.1} parent=1 // pred_region
      %44 = dma.done [#allocation4], 32
    $region25: #{tpu_custom_call.1} parent=1 // pred_fallthru
      _
    // Predicated region
    $region26: #{tpu_custom_call.1} parent=1 // pred_check
      _
    $region27: #{tpu_custom_call.1} parent=1 // pred_check_branch
      %46 = sbr.rel (0) target = $region29
    $region28: #{tpu_custom_call.1} parent=1 // pred_region
      %47 = dma.done [#allocation7], 512
    $region29: #{tpu_custom_call.1} parent=1 // pred_fallthru
      _
    %v48 = vld [vmem:[%s1] sm:$0x3]
    %v49 = vld [vmem:[#allocation3] sm:$0x3]
    %v50 = vand.u32 2147483647, %v48
    %v51 = vmul.f32 %v50, %v49
    %vm52 = vcmask 254976
    %v53 = vsel %vm52, %v51, 0.0
    %54 = vadd.xlane.f32.xlu0 %v53
    %v55 = vpop.xlane.xlu0 %54
    %v56 = vsel %vm52, %v49, 0.0
    %57 = vadd.xlane.f32.xlu0 %v56
    %v58 = vpop.xlane.xlu0 %57
    %v59 = vmax.f32 %v58, 1.0
    %v60 = vrcp.pop %v59
    %v61 = vmul.f32 %v55, %v60
    %vm62 = vcmp.gt.f32.partialorder %v58, 0.0
    %s63 = sld [smem:[#allocation2]]
    %v64 = vstv %s63
    %v65 = vsel %vm62, %v61, %v64
    %v66 = vmax.f32 %v65, 1e-10
    %v67 = vrcp.pop %v66
    %v68 = vmul.f32 %v48, %v67
    %v69 = vld [vmem:[#allocation6] sm:$0xff]
    %v70 = vld [vmem:[#allocation6 + $0x8] sm:$0xff]
    %v71 = vld [vmem:[#allocation6 + $0x10] sm:$0xff]
    %v72 = vld [vmem:[#allocation6 + $0x18] sm:$0xff]
    %v73 = vld [vmem:[%s4] sm:$0x1]
    %v75 = vlaneseq
    %v76 = vshrl.u32 %v75, 7
    %v77 = vsub.s32 0, %v76
    %v78 = vrot.slane %v73, %v77
    %vm80 = vcmask 261120
    %v82 = vsel %vm80, %v68, 0
    %84 = vmatprep.subr.mxu0 0.0
    %85 = vmatpush1.msra.mxu0 0.0
    %86 = vmatprep.subr.mxu0 0.0
    %87 = vmatpush1.msra.mxu0 0.0
    %88 = vmatprep.subr.mxu0 0.0
    %89 = vmatpush1.msra.mxu0 0.0
    %90 = vmatprep.subr.mxu0 0.0
    %91 = vmatpush1.msra.mxu0 0.0
    %92 = vmatprep.subr.mxu0 0.0
    %93 = vmatpush1.msra.mxu0 0.0
    %94 = vmatprep.subr.mxu0 0.0
    %95 = vmatpush1.msra.mxu0 0.0
    %96 = vmatprep.subr.mxu0 0.0
    %97 = vmatpush1.msra.mxu0 0.0
    %98 = vmatprep.subr.mxu0 0.0
    %99 = vmatpush1.msra.mxu0 0.0
    %100 = vmatprep.subr.mxu0 0.0
    %101 = vmatpush1.msra.mxu0 0.0
    %102 = vmatprep.subr.mxu0 0.0
    %103 = vmatpush1.msra.mxu0 0.0
    %104 = vmatprep.subr.mxu0 0.0
    %105 = vmatpush1.msra.mxu0 0.0
    %106 = vmatprep.subr.mxu0 0.0
    %107 = vmatpush1.msra.mxu0 0.0
    %108 = vmatprep.subr.mxu0 0.0
    %109 = vmatpush1.msra.mxu0 %v72
    %110 = vmatprep.subr.mxu0 0.0
    %111 = vmatpush1.msra.mxu0 %v71
    %112 = vmatprep.subr.mxu0 0.0
    %113 = vmatpush1.msra.mxu0 %v70
    %114 = vmatprep.subr.mxu0 0.0
    %115 = vmatpush1.msra.mxu0 %v69
    %116 = vmatprep.subr.mxu0 0.0
    %117 = vmatpush2.msra.mxu0 0.0
    %118 = vmatprep.subr.mxu0 0.0
    %119 = vmatpush2.msra.mxu0 0.0
    %120 = vmatprep.subr.mxu0 0.0
    %121 = vmatpush2.msra.mxu0 0.0
    %122 = vmatprep.subr.mxu0 0.0
    %123 = vmatpush2.msra.mxu0 0.0
    %124 = vmatprep.subr.mxu0 0.0
    %125 = vmatpush2.msra.mxu0 0.0
    %126 = vmatprep.subr.mxu0 0.0
    %127 = vmatpush2.msra.mxu0 0.0
    %128 = vmatprep.subr.mxu0 0.0
    %129 = vmatpush2.msra.mxu0 0.0
    %130 = vmatprep.subr.mxu0 0.0
    %131 = vmatpush2.msra.mxu0 0.0
    %132 = vmatprep.subr.mxu0 0.0
    %133 = vmatpush2.msra.mxu0 0.0
    %134 = vmatprep.subr.mxu0 0.0
    %135 = vmatpush2.msra.mxu0 0.0
    %136 = vmatprep.subr.mxu0 0.0
    %137 = vmatpush2.msra.mxu0 0.0
    %138 = vmatprep.subr.mxu0 0.0
    %139 = vmatpush2.msra.mxu0 0.0
    %140 = vmatprep.subr.mxu0 0.0
    %141 = vmatpush2.msra.mxu0 0.0
    %142 = vmatprep.subr.mxu0 0.0
    %143 = vmatpush2.msra.mxu0 0.0
    %144 = vmatprep.subr.mxu0 0.0
    %145 = vmatpush2.msra.mxu0 0.0
    %146 = vmatprep.subr.mxu0 0.0
    %147 = vmatpush2.msra.mxu0 0.0
    %148 = vmatprep.mubr.f32.mxu0 0.0
    %149 = vmatmul.mubr.f32.gmra.mxu0 %v82
    %v150 = vpop.f32.mrf.mxu0
    %v151 = vadd.f32 %v78, %v150
    %v152 = vpop.f32.mrf.mxu0
    %153 = vdwg.mxu0
    %v154 = vmax.f32 %v151, 0.0
    %v155 = vand.u32 2147483647, %v151
    %v156 = vsub.f32 0.0, %v155
    %v157 = vmul.f32 %v156, 1.442695
    %v158 = vpow.pop %v157
    %v159 = vadd.f32 %v158, 1.0
    %v160 = vlog2.pop %v159
    %v161 = vmul.f32 %v160, 0.6931472
    %v162 = vadd.f32 %v154, %v161
    %v163 = vlaneseq
    %v164 = vand.u32 %v163, 127
    %vm165 = vcmp.lt.s32.totalorder %v164, 8
    %v166 = vadd.f32 %v162, 2.0
    %vm167 = vcmp.lt.s32.totalorder %v164, 16
    %vm168 = vcmp.lt.s32.totalorder %v164, 24
    %v169 = vsel %vm168, %v162, %v66
    %v170 = vsel %vm167, %v151, %v169
    %v171 = vsel %vm165, %v166, %v170
    %172 = vst [vmem:[#allocation8] sm:$0x3] %v171
    // Predicated region
    $region30: #{tpu_custom_call.1} parent=1 // pred_check
      _
    $region31: #{tpu_custom_call.1} parent=1 // pred_check_branch
      %174 = sbr.rel (0) target = $region33
    $region32: #{tpu_custom_call.1} parent=1 // pred_region
      %s176 = ssub.s32 32, 32
      %177 = vsyncadd [#allocation5], %s176
      %s179 = sshll.u32 [#allocation8], 4
      %s180 = int_to_ptr.vmem [resolvable:$true] %s179
      %182 = dma.vmem_to_hbm [thread:$0]  %s180, 32, %s5, [#allocation5]
    $region33: #{tpu_custom_call.1} parent=1 // pred_fallthru
      _
    // Predicated region
    $region34: #{tpu_custom_call.1} parent=1 // pred_check
      _
    $region35: #{tpu_custom_call.1} parent=1 // pred_check_branch
      %184 = sbr.rel (0) target = $region37
    $region36: #{tpu_custom_call.1} parent=1 // pred_region
      %185 = dma.done [#allocation5], 32
    $region37: #{tpu_custom_call.1} parent=1 // pred_fallthru
      _
    %186 = vsyncpa [#allocation4], 1
    %187 = vsyncpa [#allocation7], 1
    %188 = vsyncpa [#allocation5], 1

</llo_original>
